<compile_context>
chip_gen: v7x
topology: tpu7x:2x2x1
jax: 0.10.0
libtpu: 0.0.40
codegen_flags: <defaults>
</compile_context>

<pallas_src>
import functools

import jax
import jax.numpy as jnp
from jax import lax
from jax.experimental import pallas as pl
from jax.experimental.pallas import tpu as pltpu


def _round_up(v, m):
    return (v + m - 1) // m * m


# --------------------------- Pallas kernel body ---------------------------
def _cconvT_kernel(x_ref, w_ref, b_ref, o_ref, *, tap_offsets, cin2, use_im2col):
    # x_ref: (2*Cin, n_in)   flattened, lightly zero-padded input of one sample
    # w_ref: (M, K)          fused complex weight, all s*s phases stacked on rows
    # b_ref: (M, 1)          fused complex bias
    # o_ref: (M, n_flat)     all-phase output, flat with row stride Wp
    n_flat = o_ref.shape[-1]
    if use_im2col:
        # im2col in VMEM: a few static ref slices stacked on sublanes,
        # then one fused MXU matmul over (taps x channels).
        cols = [x_ref[:, d:d + n_flat] for d in tap_offsets]
        xcol = cols[0] if len(cols) == 1 else jnp.concatenate(cols, axis=0)  # (K, n_flat)
        acc = jnp.dot(w_ref[...], xcol, preferred_element_type=jnp.float32)
    else:
        # Per-tap accumulating matmuls: no (K, n_flat) im2col buffer.
        acc = jnp.zeros(o_ref.shape, jnp.float32)
        for t, d in enumerate(tap_offsets):
            acc = acc + jnp.dot(w_ref[:, t * cin2:(t + 1) * cin2],
                                x_ref[:, d:d + n_flat],
                                preferred_element_type=jnp.float32)
    o_ref[...] = (acc + b_ref[...]).astype(o_ref.dtype)


# ------------------- polyphase planning (static python) -------------------
def _phase_taps(k, s, p, ph):
    """Taps of output phase `ph` along one axis: list of (input offset e, kernel idx kh).

    y[m*s + ph] += x[m + e] * w[kh]     (x is zero outside [0, size))
    """
    r = (ph + p) % s
    a = (ph + p - r) // s
    return [(a - j, kh) for j, kh in enumerate(range(r, k, s))]


def _axis_plan(in_size, out_size, k, s, p):
    taps = [_phase_taps(k, s, p, ph) for ph in range(s)]
    all_e = [e for tl in taps for (e, _) in tl] or [0]
    left = max(0, -min(all_e))                      # left zero pad
    m_per_phase = -(-out_size // s)                 # ceil(out/s), uniform per phase
    right = max(0, m_per_phase + max(all_e) - in_size)
    offsets = sorted({e + left for tl in taps for (e, _) in tl}) or [0]
    omaps = [{e + left: kh for (e, kh) in tl} for tl in taps]
    return dict(left=left, right=right, m=m_per_phase,
                padded=in_size + left + right, offsets=offsets, omaps=omaps)


# ------------------------------ public wrapper ------------------------------
def cconv_transpose2d(x, w_real, w_im, b_real, b_im, *, stride, padding=0,
                      output_padding=0, use_bf16=False, use_im2col=None):
    """Complex ConvTranspose2d.

    x:      (B, Cin, H, W, 2) float32  (PyTorch NCHW + trailing real/imag)
    w_real, w_im: (Cin, Cout, kH, kW)  (PyTorch ConvTranspose2d weight layout)
    b_real, b_im: (Cout,)
    returns (B, Cout, H_out, W_out, 2) float32
    """
    B, Cin, H, W, _ = x.shape
    _, Cout, kH, kW = w_real.shape
    s, p, op = stride, padding, output_padding
    H_out = (H - 1) * s - 2 * p + kH + op
    W_out = (W - 1) * s - 2 * p + kW + op
    assert H_out > 0 and W_out > 0

    plan_h = _axis_plan(H, H_out, kH, s, p)
    plan_w = _axis_plan(W, W_out, kW, s, p)
    Hp, Wp = plan_h["padded"], plan_w["padded"]
    # Lane-align the row stride when wide enough (tap slices become mostly
    # aligned loads); skip for small W where padding would inflate HBM traffic.
    extra_w = (_round_up(Wp, 128) - Wp) if Wp >= 512 else 0
    Wp += extra_w
    Mh, Mw = plan_h["m"], plan_w["m"]               # per-phase output rows / cols
    Oh, Ow = plan_h["offsets"], plan_w["offsets"]   # union tap offsets (static)
    n_phase = s * s
    cin2 = 2 * Cin
    n_taps = len(Oh) * len(Ow)
    K = n_taps * cin2
    M = n_phase * Cout * 2                          # all phases stacked on rows

    comp_dtype = jnp.bfloat16 if use_bf16 else jnp.float32
    dsz = jnp.dtype(comp_dtype).itemsize

    # ---- fused complex weight, all phases stacked on the M (row) axis -------
    # w_c rows = input channels [real Cin ; imag Cin]; cols = (Cout, real|imag)
    wr = jnp.transpose(w_real, (2, 3, 0, 1)).astype(jnp.float32)   # (kH, kW, Cin, Cout)
    wi = jnp.transpose(w_im, (2, 3, 0, 1)).astype(jnp.float32)
    w_c = jnp.concatenate(
        [jnp.stack([wr, wi], axis=-1),       # real-input rows
         jnp.stack([-wi, wr], axis=-1)],     # imag-input rows
        axis=2).reshape(kH, kW, cin2, Cout * 2)

    zero_blk = jnp.zeros((cin2, Cout * 2), jnp.float32)
    w_rows = []
    for mh in plan_h["omaps"]:               # output phase along H
        for mw in plan_w["omaps"]:           # output phase along W
            blocks = [w_c[mh[oh], mw[ow]] if (oh in mh and ow in mw) else zero_blk
                      for oh in Oh for ow in Ow]
            w_rows.append(jnp.concatenate(blocks, axis=0).T)       # (Cout*2, K)
    w_all = jnp.concatenate(w_rows, axis=0).astype(comp_dtype)     # (M, K)

    b_pair = jnp.stack([b_real - b_im, b_real + b_im], axis=-1).reshape(Cout * 2)
    b_all = jnp.tile(b_pair, (n_phase,)).reshape(M, 1).astype(jnp.float32)

    # ---- input: real||imag channels, lightly zero-padded, spatially flattened
    xc = jnp.concatenate([x[..., 0], x[..., 1]], axis=1)            # (B, 2Cin, H, W)
    xp = jnp.pad(xc, ((0, 0), (0, 0),
                      (plan_h["left"], plan_h["right"]),
                      (plan_w["left"], plan_w["right"] + extra_w)))
    x_flat = xp.reshape(B, cin2, Hp * Wp)

    n_flat = _round_up(Mh * Wp, 128)                # lane-dense output width
    tap_offsets = tuple(oh * Wp + ow for oh in Oh for ow in Ow)
    n_in = _round_up(max(Hp * Wp, max(tap_offsets) + n_flat), 128)
    x_flat = jnp.pad(x_flat, ((0, 0), (0, 0), (0, n_in - Hp * Wp))).astype(comp_dtype)

    if use_im2col is None:
        # im2col only pays off when the per-tap contraction depth (2Cin) would
        # starve the MXU, and only while its scratch buffer stays small.
        use_im2col = cin2 < 64 and (K * n_flat * dsz) <= (16 << 20)

    # ---- VMEM budget (accounts for BlockSpec double buffering) -------------
    per_step = (2 * cin2 * n_in * dsz            # x block (double-buffered)
                + 2 * M * K * dsz                # weight block
                + 2 * M * 4                      # bias block
                + 2 * M * n_flat * 4             # output block (double-buffered)
                + M * n_flat * 4                 # f32 accumulator
                + (K * n_flat * dsz if use_im2col else 0))
    try:
        vmem_total = int(pltpu.get_tpu_info().vmem_capacity_bytes)
    except Exception:
        vmem_total = 64 * 1024 * 1024
    vmem_cap = (vmem_total * 3) // 4             # ~48 MiB on v7x, ~96 MiB on v5e/v6e
    vmem_limit = int(min(vmem_cap, max(32 * 1024 * 1024, 2 * per_step)))

    kern = functools.partial(_cconvT_kernel, tap_offsets=tap_offsets,
                             cin2=cin2, use_im2col=use_im2col)
    out = pl.pallas_call(
        kern,
        out_shape=jax.ShapeDtypeStruct((B, M, n_flat), jnp.float32),
        grid=(B,),
        in_specs=[
            # full per-sample flat input; block index depends only on b
            pl.BlockSpec((None, cin2, n_in), lambda b: (b, 0, 0)),
            # weights / bias: constant block index -> DMA'd once, resident
            pl.BlockSpec((M, K), lambda b: (0, 0)),
            pl.BlockSpec((M, 1), lambda b: (0, 0)),
        ],
        out_specs=pl.BlockSpec((None, M, n_flat), lambda b: (b, 0, 0)),
        compiler_params=pltpu.CompilerParams(
            dimension_semantics=("parallel",),
            vmem_limit_bytes=vmem_limit),
    )(x_flat, w_all, b_all)

    # ---- epilogue: one transpose interleaves phases; r/i stack is a reshape --
    out = out[..., :Mh * Wp].reshape(B, s, s, Cout, 2, Mh, Wp)[..., :Mw]
    out = jnp.transpose(out, (0, 3, 5, 1, 6, 2, 4))   # (B, Cout, Mh, s, Mw, s, 2)
    out = out.reshape(B, Cout, Mh * s, Mw * s, 2)[:, :, :H_out, :W_out, :]
    return out


# --------------------------- pure-JAX reference ---------------------------
def _convT_ref(x_nchw, w, b, s, p, op):
    Cin, Cout, kH, kW = w.shape
    rhs = jnp.transpose(w[:, :, ::-1, ::-1], (1, 0, 2, 3))   # (Cout, Cin, kH, kW)
    out = lax.conv_general_dilated(
        x_nchw, rhs, window_strides=(1, 1),
        padding=[(kH - 1 - p, kH - 1 - p + op), (kW - 1 - p, kW - 1 - p + op)],
        lhs_dilation=(s, s),
        dimension_numbers=('NCHW', 'OIHW', 'NCHW'))
    return out + b[None, :, None, None]


def _cconvT_ref(x, w_real, w_im, b_real, b_im, s, p, op):
    xr, xi = x[..., 0], x[..., 1]
    ct_real = _convT_ref(xr, w_real, b_real, s, p, op) - _convT_ref(xi, w_im, b_im, s, p, op)
    ct_im = _convT_ref(xr, w_im, b_im, s, p, op) + _convT_ref(xi, w_real, b_real, s, p, op)
    return jnp.stack([ct_real, ct_im], axis=-1)


if __name__ == "__main__":
    key = jax.random.PRNGKey(0)

    def make_params(k_param, Cin, Cout, k):
        kwr, kwi, kbr, kbi = jax.random.split(k_param, 4)
        fan_in = Cout * k * k
        fan_out = Cin * k * k
        bound = (6.0 / (fan_in + fan_out)) ** 0.5
        w_real = jax.random.uniform(kwr, (Cin, Cout, k, k), jnp.float32, -bound, bound)
        w_im = jax.random.uniform(kwi, (Cin, Cout, k, k), jnp.float32, -bound, bound)
        b_bound = 1.0 / (fan_in ** 0.5)
        b_real = jax.random.uniform(kbr, (Cout,), jnp.float32, -b_bound, b_bound)
        b_im = jax.random.uniform(kbi, (Cout,), jnp.float32, -b_bound, b_bound)
        return w_real, w_im, b_real, b_im

    # (B, Cin, Cout, H, W, k, stride, padding, output_padding, use_im2col)
    configs = [
        (2, 4, 4, 16, 16, 3, 2, 1, 1, None),    # DCUNet-style decoder block (small)
        (2, 4, 4, 8, 8, 2, 2, 0, 0, False),     # k == s, p = 0; exercises per-tap path
        (1, 3, 5, 7, 9, 3, 3, 0, 1, None),      # s = 3, non-square spatial, op > 0
    ]
    for cfg_idx, (B, Cin, Cout, H, W, k, s, p, op, im2col) in enumerate(configs):
        kcfg, kx = jax.random.split(jax.random.fold_in(key, cfg_idx))
        w_real, w_im, b_real, b_im = make_params(kcfg, Cin, Cout, k)
        x = jax.random.normal(kx, (B, Cin, H, W, 2), jnp.float32)

        out = cconv_transpose2d(x, w_real, w_im, b_real, b_im,
                                stride=s, padding=p, output_padding=op,
                                use_im2col=im2col)
        out = jax.block_until_ready(out)

        ref = _cconvT_ref(x, w_real, w_im, b_real, b_im, s, p, op)
        H_out = (H - 1) * s - 2 * p + k + op
        W_out = (W - 1) * s - 2 * p + k + op
        assert out.shape == (B, Cout, H_out, W_out, 2), (out.shape,)
        err = float(jnp.max(jnp.abs(out - ref)))
        assert jnp.allclose(out, ref, atol=1e-4, rtol=1e-4), f"cfg {cfg_idx}: max err {err}"

    # bf16 storage path (f32 MXU accumulation) on the main config, looser tol.
    B, Cin, Cout, H, W, k, s, p, op, _ = configs[0]
    kcfg, kx = jax.random.split(jax.random.fold_in(key, 0))
    w_real, w_im, b_real, b_im = make_params(kcfg, Cin, Cout, k)
    x = jax.random.normal(kx, (B, Cin, H, W, 2), jnp.float32)
    out_bf16 = cconv_transpose2d(x, w_real, w_im, b_real, b_im,
                                 stride=s, padding=p, output_padding=op,
                                 use_bf16=True)
    out_bf16 = jax.block_until_ready(out_bf16)
    ref = _cconvT_ref(x, w_real, w_im, b_real, b_im, s, p, op)
    assert jnp.allclose(out_bf16, ref, atol=5e-2, rtol=5e-2)

    print("KERNEL_OK")
</pallas_src>

<mosaic_0001>
module attributes {stable_mosaic.version = 11 : i64} {
  func.func @_cconvT_kernel(%arg0: i32, %arg1: memref<1x8x512xf32, #tpu.memory_space<vmem>>, %arg2: memref<32x32xf32, #tpu.memory_space<vmem>>, %arg3: memref<32x1xf32, #tpu.memory_space<vmem>>, %arg4: memref<1x32x384xf32, #tpu.memory_space<vmem>>) attributes {dimension_semantics = [#tpu.dimension_semantics<parallel>], iteration_bounds = array<i64: 2>, scalar_prefetch = 0 : i64, scratch_operands = 0 : i64, tpu.core_type = #tpu.core_type<tc>, window_params = [{transform_indices = @transform_0, window_bounds = array<i64: 1, 8, 512>}, {pipeline_mode = #tpu.pipeline_mode<synchronous>, transform_indices = @transform_1, window_bounds = array<i64: 32, 32>}, {pipeline_mode = #tpu.pipeline_mode<synchronous>, transform_indices = @transform_2, window_bounds = array<i64: 32, 1>}, {transform_indices = @transform_3, window_bounds = array<i64: 1, 32, 384>}]} {
    %c0 = arith.constant 0 : index
    %c0_0 = arith.constant 0 : index
    %c0_1 = arith.constant 0 : index
    %0 = vector.load %arg1[%c0, %c0_0, %c0_1] : memref<1x8x512xf32, #tpu.memory_space<vmem>>, vector<1x8x384xf32>
    %1 = vector.shape_cast %0 : vector<1x8x384xf32> to vector<8x384xf32>
    %c0_2 = arith.constant 0 : index
    %c0_3 = arith.constant 0 : index
    %c1 = arith.constant 1 : index
    %2 = vector.load %arg1[%c0_2, %c0_3, %c1] : memref<1x8x512xf32, #tpu.memory_space<vmem>>, vector<1x8x384xf32>
    %3 = vector.shape_cast %2 : vector<1x8x384xf32> to vector<8x384xf32>
    %c0_4 = arith.constant 0 : index
    %c0_5 = arith.constant 0 : index
    %c17 = arith.constant 17 : index
    %4 = vector.load %arg1[%c0_4, %c0_5, %c17] : memref<1x8x512xf32, #tpu.memory_space<vmem>>, vector<1x8x384xf32>
    %5 = vector.shape_cast %4 : vector<1x8x384xf32> to vector<8x384xf32>
    %c0_6 = arith.constant 0 : index
    %c0_7 = arith.constant 0 : index
    %c18 = arith.constant 18 : index
    %6 = vector.load %arg1[%c0_6, %c0_7, %c18] : memref<1x8x512xf32, #tpu.memory_space<vmem>>, vector<1x8x384xf32>
    %7 = vector.shape_cast %6 : vector<1x8x384xf32> to vector<8x384xf32>
    %8 = tpu.concatenate %1, %3, %5, %7 in 0 : vector<8x384xf32>, vector<8x384xf32>, vector<8x384xf32>, vector<8x384xf32> -> vector<32x384xf32>
    %c0_8 = arith.constant 0 : index
    %c0_9 = arith.constant 0 : index
    %9 = vector.load %arg2[%c0_8, %c0_9] : memref<32x32xf32, #tpu.memory_space<vmem>>, vector<32x32xf32>
    %cst = arith.constant dense<0.000000e+00> : vector<32x384xf32>
    %10 = tpu.matmul %9, %8, %cst {dimension_numbers = #tpu.dot_dimension_numbers<[1], [0], [0], [1], [0, 0, 1, 1], [], []>} : vector<32x32xf32>, vector<32x384xf32>, vector<32x384xf32> -> vector<32x384xf32>
    %c0_10 = arith.constant 0 : index
    %c0_11 = arith.constant 0 : index
    %11 = vector.load %arg3[%c0_10, %c0_11] : memref<32x1xf32, #tpu.memory_space<vmem>>, vector<32x1xf32>
    %12 = vector.broadcast %11 : vector<32x1xf32> to vector<32x384xf32>
    %13 = arith.addf %10, %12 : vector<32x384xf32>
    %c0_12 = arith.constant 0 : index
    %c0_13 = arith.constant 0 : index
    %c0_14 = arith.constant 0 : index
    %14 = vector.load %arg4[%c0_12, %c0_13, %c0_14] : memref<1x32x384xf32, #tpu.memory_space<vmem>>, vector<1x32x384xf32>
    %15 = vector.shape_cast %14 : vector<1x32x384xf32> to vector<32x384xf32>
    %16 = vector.shape_cast %13 : vector<32x384xf32> to vector<1x32x384xf32>
    tpu.vector_store %arg4[%c0_12, %c0_13, %c0_14], %16 {strides = array<i32>} : memref<1x32x384xf32, #tpu.memory_space<vmem>>, vector<1x32x384xf32>,
    return
  }
  func.func @transform_0(%arg0: i32) -> (i32, i32, i32) {
    %c0_i32 = arith.constant 0 : i32
    %c0_i32_0 = arith.constant 0 : i32
    %c0_i32_1 = arith.constant 0 : i32
    return %arg0, %c0_i32, %c0_i32_0 : i32, i32, i32
  }
  func.func @transform_1(%arg0: i32) -> (i32, i32) {
    %c0_i32 = arith.constant 0 : i32
    %c0_i32_0 = arith.constant 0 : i32
    %c0_i32_1 = arith.constant 0 : i32
    return %c0_i32, %c0_i32_0 : i32, i32
  }
  func.func @transform_2(%arg0: i32) -> (i32, i32) {
    %c0_i32 = arith.constant 0 : i32
    %c0_i32_0 = arith.constant 0 : i32
    %c0_i32_1 = arith.constant 0 : i32
    return %c0_i32, %c0_i32_0 : i32, i32
  }
  func.func @transform_3(%arg0: i32) -> (i32, i32, i32) {
    %c0_i32 = arith.constant 0 : i32
    %c0_i32_0 = arith.constant 0 : i32
    %c0_i32_1 = arith.constant 0 : i32
    return %arg0, %c0_i32, %c0_i32_0 : i32, i32, i32
  }
}

</mosaic_0001>

<llo_original>
// kernel: tpu_custom_call.1
$region0: #{tpu_custom_call.1}
  #allocation0 [shape = 'u32[]', space=smem, size = 0x4, offset = 0x4, fixed_abs, tag = 'smem constant byte address 0x4 - core index']
  #allocation1 [shape = 'u32[144,128]{1,0:T(1,128)}', space=vmem, size = 0x12000, scoped, tag = 'internal scratch']
  %s0 = inlined_call_operand.hbm [shape: f32[2,8,512], index: 0, kind: input, shape index: {}]
  %s1 = inlined_call_operand.vmem [shape: f32[32,32], index: 1, kind: input, shape index: {}]
  %s2 = inlined_call_operand.vmem [shape: f32[32,1], index: 2, kind: input, shape index: {}]
  %s3 = inlined_call_operand.hbm [shape: f32[2,32,384], index: 3, kind: output, shape index: {}]
  %s4 = sld [smem:[#allocation0]]
  $region49: #{tpu_custom_call.1} parent=0
    _
  %s6 = ssub.s32 1, %s4
  %s7 = scalar_select 0, %s6, %s4
  $region1: #{tpu_custom_call.1} parent=0
    #allocation2 [shape = 'u8[32768]{0}', space=vmem, size = 0x8000, scoped, tag = 'input window, operand 0']
    #allocation3 [shape = 's32[2]{0}', space=sflag, size = 0x8, scoped, tag = 'scoped memory for tpu_custom_call.1']
    #allocation4 [shape = 's32[2]{0}', space=sflag, size = 0x8, scoped, tag = 'scoped memory for tpu_custom_call.1']
    #allocation5 [shape = 'u8[98304]{0}', space=vmem, size = 0x18000, scoped, tag = 'output window, operand 0']
    %8 = vsyncpa [#allocation3], 0
    %s9 = scalar_lea.sflag [#allocation3], 1
    %10 = vsyncpa %s9, 0
    %11 = vsyncpa [#allocation4], 0
    %s12 = scalar_lea.sflag [#allocation4], 1
    %13 = vsyncpa %s12, 0
    loop: start=0, step=1, limit=4
    $region2: #{tpu_custom_call.1} parent=1 // loop_pre_header
      _
    $region3: #{tpu_custom_call.1} parent=1 // loop_header
      %s15 = sphi 0, %s19
      %p16 = scmp.ge.s32.totalorder %s15, 4
      %s25 = sphi 0, %s27
      %s28 = sphi 0, %s25
      %s29 = sphi 0, %s28
      %s45 = sphi 0, %s29
      %s49 = sphi 0, %s49
      %s51 = sphi 0, %s49
      %s52 = sphi 0, %s51
      %s66 = sphi 0, %s52
      %s70 = sphi 0, %s70
      %s72 = sphi 0, %s70
      %s73 = sphi 0, %s72
      %s87 = sphi 0, %s73
      %s93 = sphi 0, %s95
      %s96 = sphi 0, %s93
      %s97 = sphi 0, %s96
      %s113 = sphi 0, %s97
    $region4: #{tpu_custom_call.1} parent=1 // loop_header_branch
      %18 = sbr.rel (%p16) target = $region8
    $region5: #{tpu_custom_call.1} parent=1 // loop_body
      %s20 = ssub.s32 %s15, 1
      %s21 = ssub.s32 %s15, 2
      %s22 = sadd.s32 %s15, 1
      %s23 = ssub.s32 %s15, %s22
      %p24 = scmp.eq.s32.totalorder %s23, 0
      %s26 = sadd.s32 %s25, 1
      %s27 = scalar_select %p24, %s25, %s26
      %p30 = pneg %p24
      %p31 = scmp.eq.s32.totalorder %s15, 1
      %p32 = por %p30, %p31
      %p33 = scmp.ne.s32.totalorder %s25, %s28
      %p34 = scmp.eq.s32.totalorder %s15, 0
      %p35 = por %p33, %p34
      %p36 = scmp.ne.s32.totalorder %s25, %s28
      %p37 = scmp.eq.s32.totalorder %s20, 1
      %p38 = por %p36, %p37
      %p39 = scmp.ne.s32.totalorder %s28, %s29
      %p40 = scmp.eq.s32.totalorder %s20, 0
      %p41 = por %p39, %p40
      %p42 = scmp.ne.s32.totalorder %s28, %s29
      %p43 = scmp.eq.s32.totalorder %s21, 1
      %p44 = por %p42, %p43
      %p46 = scmp.ne.s32.totalorder %s29, %s45
      %p47 = scmp.eq.s32.totalorder %s21, 0
      %p48 = por %p46, %p47
      %s50 = sadd.s32 %s49, 1
      %p53 = scmp.eq.s32.totalorder %s15, 1
      %p54 = scmp.ne.s32.totalorder %s49, %s51
      %p55 = scmp.eq.s32.totalorder %s15, 0
      %p56 = por %p54, %p55
      %p57 = scmp.ne.s32.totalorder %s49, %s51
      %p58 = scmp.eq.s32.totalorder %s20, 1
      %p59 = por %p57, %p58
      %p60 = scmp.ne.s32.totalorder %s51, %s52
      %p61 = scmp.eq.s32.totalorder %s20, 0
      %p62 = por %p60, %p61
      %p63 = scmp.ne.s32.totalorder %s51, %s52
      %p64 = scmp.eq.s32.totalorder %s21, 1
      %p65 = por %p63, %p64
      %p67 = scmp.ne.s32.totalorder %s52, %s66
      %p68 = scmp.eq.s32.totalorder %s21, 0
      %p69 = por %p67, %p68
      %s71 = sadd.s32 %s70, 1
      %p74 = scmp.eq.s32.totalorder %s15, 1
      %p75 = scmp.ne.s32.totalorder %s70, %s72
      %p76 = scmp.eq.s32.totalorder %s15, 0
      %p77 = por %p75, %p76
      %p78 = scmp.ne.s32.totalorder %s70, %s72
      %p79 = scmp.eq.s32.totalorder %s20, 1
      %p80 = por %p78, %p79
      %p81 = scmp.ne.s32.totalorder %s72, %s73
      %p82 = scmp.eq.s32.totalorder %s20, 0
      %p83 = por %p81, %p82
      %p84 = scmp.ne.s32.totalorder %s72, %s73
      %p85 = scmp.eq.s32.totalorder %s21, 1
      %p86 = por %p84, %p85
      %p88 = scmp.ne.s32.totalorder %s73, %s87
      %p89 = scmp.eq.s32.totalorder %s21, 0
      %p90 = por %p88, %p89
      %s91 = ssub.s32 %s15, %s22
      %p92 = scmp.eq.s32.totalorder %s91, 0
      %s94 = sadd.s32 %s93, 1
      %s95 = scalar_select %p92, %s93, %s94
      %p98 = pneg %p92
      %p99 = scmp.eq.s32.totalorder %s15, 1
      %p100 = por %p98, %p99
      %p101 = scmp.ne.s32.totalorder %s93, %s96
      %p102 = scmp.eq.s32.totalorder %s15, 0
      %p103 = por %p101, %p102
      %p104 = scmp.ne.s32.totalorder %s93, %s96
      %p105 = scmp.eq.s32.totalorder %s20, 1
      %p106 = por %p104, %p105
      %p107 = scmp.ne.s32.totalorder %s96, %s97
      %p108 = scmp.eq.s32.totalorder %s20, 0
      %p109 = por %p107, %p108
      %p110 = scmp.ne.s32.totalorder %s96, %s97
      %p111 = scmp.eq.s32.totalorder %s21, 1
      %p112 = por %p110, %p111
      %p114 = scmp.ne.s32.totalorder %s97, %s113
      %p115 = scmp.eq.s32.totalorder %s21, 0
      %p116 = por %p114, %p115
      %p117 = scmp.le.s32.totalorder 1, %s15
      %p118 = scmp.lt.s32.totalorder %s15, 3
      %p119 = pnand %p117, %p118
      %p120 = pneg %p119
      // Predicated region
      $region9: #{tpu_custom_call.1} parent=5 // pred_check
        _
      $region10: #{tpu_custom_call.1} parent=5 // pred_check_branch
        %122 = sbr.rel (%p119) target = $region12
      $region11: #{tpu_custom_call.1} parent=5 // pred_region
        %s123 = ssub.s32 %s15, 1
        // Predicated region
        $region13: #{tpu_custom_call.1} parent=11 // pred_check
          %p124 = pneg %p62
        $region14: #{tpu_custom_call.1} parent=11 // pred_check_branch
          %126 = sbr.rel (%p124) target = $region16
        $region15: #{tpu_custom_call.1} parent=11 // pred_region
          _
        $region16: #{tpu_custom_call.1} parent=11 // pred_fallthru
          _
        // Predicated region
        $region17: #{tpu_custom_call.1} parent=11 // pred_check
          %p127 = pneg %p83
        $region18: #{tpu_custom_call.1} parent=11 // pred_check_branch
          %129 = sbr.rel (%p127) target = $region20
        $region19: #{tpu_custom_call.1} parent=11 // pred_region
          _
        $region20: #{tpu_custom_call.1} parent=11 // pred_fallthru
          _
      $region12: #{tpu_custom_call.1} parent=5 // pred_fallthru
        _
      %p130 = scmp.lt.s32.totalorder %s15, 2
      // Predicated region
      $region21: #{tpu_custom_call.1} parent=5 // pred_check
        %p131 = pneg %p130
      $region22: #{tpu_custom_call.1} parent=5 // pred_check_branch
        %133 = sbr.rel (%p131) target = $region24
      $region23: #{tpu_custom_call.1} parent=5 // pred_region
        // Predicated region
        $region25: #{tpu_custom_call.1} parent=23 // pred_check
          %p134 = pneg %p35
        $region26: #{tpu_custom_call.1} parent=23 // pred_check_branch
          %136 = sbr.rel (%p134) target = $region28
        $region27: #{tpu_custom_call.1} parent=23 // pred_region
          %s137 = sand.u32 %s25, 1
          %s138 = scalar_lea.sflag [#allocation3], %s137
          %s139 = sand.u32 %s25, 1
          %s140 = smul.addr %s139, 32
          %s141 = scalar_lea.vmem [#allocation2], %s140
          %s143 = ssub.s32 512, 512
          %144 = vsyncadd %s138, %s143
          %s145 = smul.addr %s15, 4
          %s146 = smul.addr %s145, 128
          %s147 = scalar_lea.hbm %s0, %s146
          %s149 = sshll.u32 %s141, 4
          %s150 = int_to_ptr.vmem [resolvable:$true] %s149
          %152 = dma.hbm_to_vmem [thread:$0]  %s147, 512, %s150, %s138
        $region28: #{tpu_custom_call.1} parent=23 // pred_fallthru
          _
      $region24: #{tpu_custom_call.1} parent=5 // pred_fallthru
        _
      %p153 = scmp.le.s32.totalorder 1, %s15
      %p154 = scmp.lt.s32.totalorder %s15, 3
      %p155 = pnand %p153, %p154
      %p156 = pneg %p155
      // Predicated region
      $region29: #{tpu_custom_call.1} parent=5 // pred_check
        _
      $region30: #{tpu_custom_call.1} parent=5 // pred_check_branch
        %158 = sbr.rel (%p155) target = $region32
      $region31: #{tpu_custom_call.1} parent=5 // pred_region
        %s159 = ssub.s32 %s15, 1
        %s160 = sand.u32 %s28, 1
        %s161 = scalar_lea.sflag [#allocation3], %s160
        %s162 = sand.u32 %s28, 1
        %s163 = smul.addr %s162, 32
        %s164 = scalar_lea.vmem [#allocation2], %s163
        // Predicated region
        $region33: #{tpu_custom_call.1} parent=31 // pred_check
          %p165 = pneg %p41
        $region34: #{tpu_custom_call.1} parent=31 // pred_check_branch
          %167 = sbr.rel (%p165) target = $region36
        $region35: #{tpu_custom_call.1} parent=31 // pred_region
          %168 = dma.done %s161, 512
        $region36: #{tpu_custom_call.1} parent=31 // pred_fallthru
          _
        %s169 = sand.u32 %s28, 1
        %s170 = scalar_lea.sflag [#allocation3], %s169
        %s171 = sand.u32 %s28, 1
        %s172 = smul.addr %s171, 32
        %s173 = scalar_lea.vmem [#allocation2], %s172
        %p174 = pneg %p41
        %p175 = pneg %p38
        %p176 = pneg %p62
        %p177 = pneg %p59
        %p178 = pneg %p83
        %p179 = pneg %p80
        %p180 = pneg %p109
        %p181 = pneg %p106
        %s182 = sand.u32 %s96, 1
        %s183 = scalar_lea.sflag [#allocation4], %s182
        %s184 = sand.u32 %s96, 1
        %s185 = smul.addr %s184, 96
        %s186 = scalar_lea.vmem [#allocation5], %s185
        %v187 = vld [vmem:[%s164] sm:$0xff]
        %v188 = vld [vmem:[%s164 + $0x8] sm:$0xff]
        %v189 = vld [vmem:[%s164 + $0x10] sm:$0xff]
        %v190 = vld [vmem:[%s164] sm:$0xff]
        %v191 = vld [vmem:[%s164 + $0x8] sm:$0xff]
        %v192 = vld [vmem:[%s164 + $0x10] sm:$0xff]
        %v193 = vld [vmem:[%s164 + $0x18] sm:$0xff]
        %198 = vrot.lane.b32.xlu0 %v190, 127
        %v199 = vpop.permute.xlu0 %198
        %200 = vrot.lane.b32.xlu0 %v191, 127
        %v201 = vpop.permute.xlu0 %200
        %202 = vrot.lane.b32.xlu0 %v192, 127
        %v203 = vpop.permute.xlu0 %202
        %204 = vrot.lane.b32.xlu0 %v193, 127
        %v205 = vpop.permute.xlu0 %204
        %vm206 = vcmask 1039360
        %v207 = vsel %vm206, %v199, %v201
        %v208 = vsel %vm206, %v201, %v203
        %v209 = vsel %vm206, %v203, %v205
        %213 = vrot.lane.b32.xlu0 %v190, 111
        %v214 = vpop.permute.xlu0 %213
        %215 = vrot.lane.b32.xlu0 %v191, 111
        %v216 = vpop.permute.xlu0 %215
        %217 = vrot.lane.b32.xlu0 %v192, 111
        %v218 = vpop.permute.xlu0 %217
        %219 = vrot.lane.b32.xlu0 %v193, 111
        %v220 = vpop.permute.xlu0 %219
        %vm221 = vcmask 908288
        %v222 = vsel %vm221, %v214, %v216
        %v223 = vsel %vm221, %v216, %v218
        %v224 = vsel %vm221, %v218, %v220
        %228 = vrot.lane.b32.xlu0 %v190, 110
        %v229 = vpop.permute.xlu0 %228
        %230 = vrot.lane.b32.xlu0 %v191, 110
        %v231 = vpop.permute.xlu0 %230
        %232 = vrot.lane.b32.xlu0 %v192, 110
        %v233 = vpop.permute.xlu0 %232
        %234 = vrot.lane.b32.xlu0 %v193, 110
        %v235 = vpop.permute.xlu0 %234
        %vm236 = vcmask 900096
        %v237 = vsel %vm236, %v229, %v231
        %v238 = vsel %vm236, %v231, %v233
        %v239 = vsel %vm236, %v233, %v235
        %v243 = vld [vmem:[%s1] sm:$0xff]
        %v244 = vld [vmem:[%s1 + $0x8] sm:$0xff]
        %v245 = vld [vmem:[%s1 + $0x10] sm:$0xff]
        %v246 = vld [vmem:[%s1 + $0x18] sm:$0xff]
        %v247 = vld [vmem:[%s2] sm:$0xff]
        %v248 = vld [vmem:[%s2 + $0x8] sm:$0xff]
        %v249 = vld [vmem:[%s2 + $0x10] sm:$0xff]
        %v250 = vld [vmem:[%s2 + $0x18] sm:$0xff]
        %252 = vset.pattern.permute.xlu0 0
        %253 = vperm.xlu0 %252, %v247
        %v254 = vpop.permute.xlu0 %253
        %257 = vset.pattern.permute.xlu0 0
        %258 = vperm.xlu0 %257, %v248
        %v259 = vpop.permute.xlu0 %258
        %262 = vset.pattern.permute.xlu0 0
        %263 = vperm.xlu0 %262, %v249
        %v264 = vpop.permute.xlu0 %263
        %267 = vset.pattern.permute.xlu0 0
        %268 = vperm.xlu0 %267, %v250
        %v269 = vpop.permute.xlu0 %268
        %vm271 = vcmask 261120
        %v273 = vsel %vm271, %v243, 0
        %v276 = vsel %vm271, %v244, 0
        %v279 = vsel %vm271, %v245, 0
        %v282 = vsel %vm271, %v246, 0
        %284 = vmatprep.subr.mxu0 %v188
        %285 = vmatpush1.msra.mxu0 %v187
        %286 = vmatprep.subr.mxu0 %v208
        %287 = vmatpush1.msra.mxu0 %v207
        %288 = vmatprep.subr.mxu0 %v223
        %289 = vmatpush1.msra.mxu0 %v222
        %290 = vmatprep.subr.mxu0 %v238
        %291 = vmatpush1.msra.mxu0 %v237
        %292 = vmatprep.subr.mxu0 0.0
        %293 = vmatpush1.msra.mxu0 0.0
        %294 = vmatprep.subr.mxu0 0.0
        %295 = vmatpush1.msra.mxu0 0.0
        %296 = vmatprep.subr.mxu0 0.0
        %297 = vmatpush1.msra.mxu0 0.0
        %298 = vmatprep.subr.mxu0 0.0
        %299 = vmatpush1.msra.mxu0 0.0
        %300 = vmatprep.subr.mxu0 0.0
        %301 = vmatpush1.msra.mxu0 0.0
        %302 = vmatprep.subr.mxu0 0.0
        %303 = vmatpush1.msra.mxu0 0.0
        %304 = vmatprep.subr.mxu0 0.0
        %305 = vmatpush1.msra.mxu0 0.0
        %306 = vmatprep.subr.mxu0 0.0
        %307 = vmatpush1.msra.mxu0 0.0
        %308 = vmatprep.subr.mxu0 0.0
        %309 = vmatpush1.msra.mxu0 0.0
        %310 = vmatprep.subr.mxu0 0.0
        %311 = vmatpush1.msra.mxu0 0.0
        %312 = vmatprep.subr.mxu0 0.0
        %313 = vmatpush1.msra.mxu0 0.0
        %314 = vmatprep.subr.mxu0 0.0
        %315 = vmatpush1.msra.mxu0 0.0
        %316 = vmatprep.subr.mxu0 0.0
        %317 = vmatpush1.msra.mxu0 0.0
        %318 = vmatprep.subr.mxu0 0.0
        %319 = vmatpush1.msra.mxu0 0.0
        %320 = vmatprep.subr.mxu0 0.0
        %321 = vmatpush1.msra.mxu0 0.0
        %322 = vmatprep.subr.mxu0 0.0
        %323 = vmatpush1.msra.mxu0 0.0
        %324 = vmatprep.subr.mxu0 0.0
        %325 = vmatpush1.msra.mxu0 0.0
        %326 = vmatprep.subr.mxu0 0.0
        %327 = vmatpush1.msra.mxu0 0.0
        %328 = vmatprep.subr.mxu0 0.0
        %329 = vmatpush1.msra.mxu0 0.0
        %330 = vmatprep.subr.mxu0 0.0
        %331 = vmatpush1.msra.mxu0 0.0
        %332 = vmatprep.subr.mxu0 0.0
        %333 = vmatpush1.msra.mxu0 0.0
        %334 = vmatprep.subr.mxu0 0.0
        %335 = vmatpush1.msra.mxu0 0.0
        %336 = vmatprep.subr.mxu0 0.0
        %337 = vmatpush1.msra.mxu0 0.0
        %338 = vmatprep.subr.mxu0 0.0
        %339 = vmatpush1.msra.mxu0 0.0
        %340 = vmatprep.subr.mxu0 0.0
        %341 = vmatpush1.msra.mxu0 0.0
        %342 = vmatprep.subr.mxu0 0.0
        %343 = vmatpush1.msra.mxu0 0.0
        %344 = vmatprep.subr.mxu0 0.0
        %345 = vmatpush1.msra.mxu0 0.0
        %346 = vmatprep.subr.mxu0 0.0
        %347 = vmatpush1.msra.mxu0 0.0
        %348 = vmatprep.mubr.f32.mxu0 0.0
        %349 = vmatmul.mubr.f32.gmra.mrb[0].mxu0 %v273
        %v350 = vpop.f32.mrb[0].mxu0
        %v351 = vadd.f32 %v254, %v350
        %v352 = vpop.f32.mrb[0].mxu0
        %v353 = vadd.f32 %v254, %v352
        %354 = vmatprep.mubr.f32.mxu0 0.0
        %355 = vmatmul.mubr.f32.gmra.mrb[0].mxu0 %v276
        %v356 = vpop.f32.mrb[0].mxu0
        %v357 = vadd.f32 %v259, %v356
        %v358 = vpop.f32.mrb[0].mxu0
        %v359 = vadd.f32 %v259, %v358
        %360 = vmatprep.mubr.f32.mxu0 0.0
        %361 = vmatmul.mubr.f32.gmra.mrb[0].mxu0 %v279
        %v362 = vpop.f32.mrb[0].mxu0
        %v363 = vadd.f32 %v264, %v362
        %v364 = vpop.f32.mrb[0].mxu0
        %v365 = vadd.f32 %v264, %v364
        %366 = vmatprep.mubr.f32.mxu0 0.0
        %367 = vmatmul.mubr.f32.gmra.mrb[0].mxu0 %v282
        %v368 = vpop.f32.mrb[0].mxu0
        %v369 = vadd.f32 %v269, %v368
        %v370 = vpop.f32.mrb[0].mxu0
        %v371 = vadd.f32 %v269, %v370
        %372 = vdwg.mxu0
        %373 = vmatprep.subr.mxu0 0.0
        %374 = vmatpush1.msra.mxu0 %v189
        %375 = vmatprep.subr.mxu0 0.0
        %376 = vmatpush1.msra.mxu0 %v209
        %377 = vmatprep.subr.mxu0 0.0
        %378 = vmatpush1.msra.mxu0 %v224
        %379 = vmatprep.subr.mxu0 0.0
        %380 = vmatpush1.msra.mxu0 %v239
        %381 = vmatprep.subr.mxu0 0.0
        %382 = vmatpush1.msra.mxu0 0.0
        %383 = vmatprep.subr.mxu0 0.0
        %384 = vmatpush1.msra.mxu0 0.0
        %385 = vmatprep.subr.mxu0 0.0
        %386 = vmatpush1.msra.mxu0 0.0
        %387 = vmatprep.subr.mxu0 0.0
        %388 = vmatpush1.msra.mxu0 0.0
        %389 = vmatprep.subr.mxu0 0.0
        %390 = vmatpush1.msra.mxu0 0.0
        %391 = vmatprep.subr.mxu0 0.0
        %392 = vmatpush1.msra.mxu0 0.0
        %393 = vmatprep.subr.mxu0 0.0
        %394 = vmatpush1.msra.mxu0 0.0
        %395 = vmatprep.subr.mxu0 0.0
        %396 = vmatpush1.msra.mxu0 0.0
        %397 = vmatprep.subr.mxu0 0.0
        %398 = vmatpush1.msra.mxu0 0.0
        %399 = vmatprep.subr.mxu0 0.0
        %400 = vmatpush1.msra.mxu0 0.0
        %401 = vmatprep.subr.mxu0 0.0
        %402 = vmatpush1.msra.mxu0 0.0
        %403 = vmatprep.subr.mxu0 0.0
        %404 = vmatpush1.msra.mxu0 0.0
        %405 = vmatprep.subr.mxu0 0.0
        %406 = vmatpush1.msra.mxu0 0.0
        %407 = vmatprep.subr.mxu0 0.0
        %408 = vmatpush1.msra.mxu0 0.0
        %409 = vmatprep.subr.mxu0 0.0
        %410 = vmatpush1.msra.mxu0 0.0
        %411 = vmatprep.subr.mxu0 0.0
        %412 = vmatpush1.msra.mxu0 0.0
        %413 = vmatprep.subr.mxu0 0.0
        %414 = vmatpush1.msra.mxu0 0.0
        %415 = vmatprep.subr.mxu0 0.0
        %416 = vmatpush1.msra.mxu0 0.0
        %417 = vmatprep.subr.mxu0 0.0
        %418 = vmatpush1.msra.mxu0 0.0
        %419 = vmatprep.subr.mxu0 0.0
        %420 = vmatpush1.msra.mxu0 0.0
        %421 = vmatprep.subr.mxu0 0.0
        %422 = vmatpush1.msra.mxu0 0.0
        %423 = vmatprep.subr.mxu0 0.0
        %424 = vmatpush1.msra.mxu0 0.0
        %425 = vmatprep.subr.mxu0 0.0
        %426 = vmatpush1.msra.mxu0 0.0
        %427 = vmatprep.subr.mxu0 0.0
        %428 = vmatpush1.msra.mxu0 0.0
        %429 = vmatprep.subr.mxu0 0.0
        %430 = vmatpush1.msra.mxu0 0.0
        %431 = vmatprep.subr.mxu0 0.0
        %432 = vmatpush1.msra.mxu0 0.0
        %433 = vmatprep.subr.mxu0 0.0
        %434 = vmatpush1.msra.mxu0 0.0
        %435 = vmatprep.subr.mxu0 0.0
        %436 = vmatpush1.msra.mxu0 0.0
        %437 = vmatprep.mubr.f32.mxu0 0.0
        %438 = vmatmul.mubr.f32.gmra.mrb[0].mxu0 %v273
        %v439 = vpop.f32.mrb[0].mxu0
        %v440 = vadd.f32 %v254, %v439
        %v441 = vpop.f32.mrb[0].mxu0
        %442 = vmatprep.mubr.f32.mxu0 0.0
        %443 = vmatmul.mubr.f32.gmra.mrb[0].mxu0 %v276
        %v444 = vpop.f32.mrb[0].mxu0
        %v445 = vadd.f32 %v259, %v444
        %v446 = vpop.f32.mrb[0].mxu0
        %447 = vmatprep.mubr.f32.mxu0 0.0
        %448 = vmatmul.mubr.f32.gmra.mrb[0].mxu0 %v279
        %v449 = vpop.f32.mrb[0].mxu0
        %v450 = vadd.f32 %v264, %v449
        %v451 = vpop.f32.mrb[0].mxu0
        %452 = vmatprep.mubr.f32.mxu0 0.0
        %453 = vmatmul.mubr.f32.gmra.mrb[0].mxu0 %v282
        %v454 = vpop.f32.mrb[0].mxu0
        %v455 = vadd.f32 %v269, %v454
        %v456 = vpop.f32.mrb[0].mxu0
        %457 = vdwg.mxu0
        %458 = vst [vmem:[%s186] sm:$0xff] %v351
        %459 = vst [vmem:[%s186 + $0x8] sm:$0xff] %v353
        %460 = vst [vmem:[%s186 + $0x10] sm:$0xff] %v440
        %461 = vst [vmem:[%s186 + $0x18] sm:$0xff] %v357
        %462 = vst [vmem:[%s186 + $0x20] sm:$0xff] %v359
        %463 = vst [vmem:[%s186 + $0x28] sm:$0xff] %v445
        %464 = vst [vmem:[%s186 + $0x30] sm:$0xff] %v363
        %465 = vst [vmem:[%s186 + $0x38] sm:$0xff] %v365
        %466 = vst [vmem:[%s186 + $0x40] sm:$0xff] %v450
        %467 = vst [vmem:[%s186 + $0x48] sm:$0xff] %v369
        %468 = vst [vmem:[%s186 + $0x50] sm:$0xff] %v371
        %469 = vst [vmem:[%s186 + $0x58] sm:$0xff] %v455
        %s470 = sand.u32 %s96, 1
        %s471 = scalar_lea.sflag [#allocation4], %s470
        %s472 = sand.u32 %s96, 1
        %s473 = smul.addr %s472, 96
        %s474 = scalar_lea.vmem [#allocation5], %s473
        // Predicated region
        $region37: #{tpu_custom_call.1} parent=31 // pred_check
          %p475 = pneg %p106
        $region38: #{tpu_custom_call.1} parent=31 // pred_check_branch
          %477 = sbr.rel (%p475) target = $region40
        $region39: #{tpu_custom_call.1} parent=31 // pred_region
          %s479 = ssub.s32 1536, 1536
          %480 = vsyncadd %s471, %s479
          %s481 = smul.addr %s20, 12
          %s482 = smul.addr %s481, 128
          %s483 = scalar_lea.hbm %s3, %s482
          %s484 = sshll.u32 %s474, 4
          %s485 = int_to_ptr.vmem [resolvable:$true] %s484
          %490 = dma.vmem_to_hbm [thread:$0]  %s485, 1536, %s483, %s471, 384, 384, 24
        $region40: #{tpu_custom_call.1} parent=31 // pred_fallthru
          _
      $region32: #{tpu_custom_call.1} parent=5 // pred_fallthru
        _
      %p491 = scmp.le.s32.totalorder 2, %s15
      // Predicated region
      $region41: #{tpu_custom_call.1} parent=5 // pred_check
        %p492 = pneg %p491
      $region42: #{tpu_custom_call.1} parent=5 // pred_check_branch
        %494 = sbr.rel (%p492) target = $region44
      $region43: #{tpu_custom_call.1} parent=5 // pred_region
        %s495 = ssub.s32 %s15, 2
        // Predicated region
        $region45: #{tpu_custom_call.1} parent=43 // pred_check
          %p496 = pneg %p112
        $region46: #{tpu_custom_call.1} parent=43 // pred_check_branch
          %498 = sbr.rel (%p496) target = $region48
        $region47: #{tpu_custom_call.1} parent=43 // pred_region
          %s499 = sand.u32 %s97, 1
          %s500 = scalar_lea.sflag [#allocation4], %s499
          %s501 = sand.u32 %s97, 1
          %s502 = smul.addr %s501, 96
          %s503 = scalar_lea.vmem [#allocation5], %s502
          %504 = dma.done %s500, 1536
        $region48: #{tpu_custom_call.1} parent=43 // pred_fallthru
          _
      $region44: #{tpu_custom_call.1} parent=5 // pred_fallthru
        _
    $region6: #{tpu_custom_call.1} parent=1 // loop_footer
      %s19 = sadd.s32 1, %s15
    $region7: #{tpu_custom_call.1} parent=1 // loop_footer_branch
      %14 = sbr.rel target = $region3
    $region8: #{tpu_custom_call.1} parent=1 // loop_exit
      _
    %505 = vsyncpa [#allocation3], 1
    %s506 = scalar_lea.sflag [#allocation3], 1
    %507 = vsyncpa %s506, 1
    %508 = vsyncpa [#allocation4], 1
    %s509 = scalar_lea.sflag [#allocation4], 1
    %510 = vsyncpa %s509, 1

</llo_original>
